<compile_context>
chip_gen: v7x
topology: tpu7x:2x2x1
jax: 0.10.0
libtpu: 0.0.40
codegen_flags: <defaults>
</compile_context>

<pallas_src>
import jax
import jax.numpy as jnp
from jax.experimental import pallas as pl
from jax.experimental.pallas import tpu as pltpu


def _round_up(x, m):
    return (x + m - 1) // m * m


def _vmem_capacity_bytes():
    try:
        return int(pltpu.get_tpu_info().vmem_capacity_bytes)
    except Exception:
        return 64 << 20  # conservative fallback (v7x-sized)


def generator_kernel(x_ref, w_ref, b_ref, logits_ref, lse_ref, m_ref, l_ref):
    j = pl.program_id(1)

    @pl.when(j == 0)
    def _():
        m_ref[...] = jnp.full_like(m_ref, -jnp.inf)
        l_ref[...] = jnp.zeros_like(l_ref)

    # Linear for this (row tile, vocab tile): MXU matmul, f32 accumulate,
    # f32 bias add (bias is already f32 — no redundant cast).
    logits = jnp.dot(x_ref[...], w_ref[...],
                     preferred_element_type=jnp.float32)
    logits = logits + b_ref[...]

    # Per-(i, j) output block: unnormalized logits stream straight to HBM
    # (lane-dense, pipelines per vocab tile; no full-vocab VMEM residency).
    logits_ref[...] = logits.astype(logits_ref.dtype)

    # Online max / sum-of-exp update (numerically stable log-sum-exp).
    m_prev = m_ref[...]
    m_new = jnp.maximum(m_prev, jnp.max(logits, axis=-1, keepdims=True))
    l_ref[...] = (l_ref[...] * jnp.exp(m_prev - m_new)
                  + jnp.sum(jnp.exp(logits - m_new), axis=-1, keepdims=True))
    m_ref[...] = m_new

    @pl.when(j == pl.num_programs(1) - 1)
    def _():
        lse_ref[...] = m_ref[...] + jnp.log(l_ref[...])


def generator_forward(x, weight, bias, *, tm=None, tn=None,
                      compute_dtype=jnp.bfloat16, out_dtype=None,
                      inter_dtype=jnp.float32):
    """log_softmax(x @ weight + bias, axis=-1).

    x: (batch, seq, d_model); weight: (d_model, vocab); bias: (vocab,).
    """
    batch, seq, d_model = x.shape
    d_model_w, vocab = weight.shape
    assert d_model_w == d_model
    out_dtype = out_dtype if out_dtype is not None else x.dtype
    compute_dtype = compute_dtype if compute_dtype is not None else x.dtype

    M = batch * seq
    vmem_cap = _vmem_capacity_bytes()
    small_vmem = vmem_cap <= (64 << 20)          # v7x-class
    op_itemsize = jnp.dtype(compute_dtype).itemsize
    inter_itemsize = jnp.dtype(inter_dtype).itemsize

    # --- Vocab (lane) tiling: scale tn with d_model and operand itemsize. ---
    vocab_pad128 = _round_up(vocab, 128)
    if tn is None:
        w_tile_budget = (12 << 20) if small_vmem else (24 << 20)
        tn = w_tile_budget // (2 * d_model * op_itemsize)
        tn = max(256, tn // 256 * 256)
        tn = min(tn, 4096)
    tn = _round_up(tn, 128)
    tn = min(tn, vocab_pad128)
    vocab_pad = _round_up(vocab_pad128, tn)

    # --- Row tiling (pad M; shrink tm for tiny inputs; keep >= 2 tiles so the
    # "parallel" axis can feed both TensorCores on v7x). ---
    m_pad8 = _round_up(M, 8)
    if tm is None:
        tm = 256 if small_vmem else 512
    tm = _round_up(min(tm, m_pad8), 8)
    if m_pad8 >= 16 and m_pad8 // tm < 2:
        tm = _round_up((m_pad8 + 1) // 2, 8)
    m_pad = _round_up(m_pad8, tm)

    x2d = x.reshape(M, d_model)
    if m_pad != M:
        x2d = jnp.pad(x2d, ((0, m_pad - M), (0, 0)))

    w = weight
    b = bias.astype(jnp.float32)
    if vocab_pad != vocab:
        # Padded vocab columns: zero weights + very negative bias so their
        # exp contribution to the LSE is exactly 0 (no -inf to avoid NaNs).
        w = jnp.pad(w, ((0, 0), (0, vocab_pad - vocab)))
        b = jnp.pad(b, ((0, vocab_pad - vocab),), constant_values=-1e30)
    b2d = b.reshape(1, vocab_pad)

    x2d = x2d.astype(compute_dtype)
    w = w.astype(compute_dtype)

    n_i = m_pad // tm
    n_j = vocab_pad // tn
    grid = (n_i, n_j)

    cost = pl.CostEstimate(
        flops=2 * m_pad * d_model * vocab_pad,
        transcendentals=m_pad * vocab_pad,
        bytes_accessed=(x2d.size * x2d.dtype.itemsize            # x read once
                        + n_i * w.size * w.dtype.itemsize        # W per row tile
                        + n_i * b2d.size * 4
                        + m_pad * vocab_pad * inter_itemsize     # raw logits
                        + m_pad * 4),                            # lse
    )

    # Double-buffered tile footprint + headroom, clamped generation-aware.
    vmem_est = (2 * tm * d_model * op_itemsize      # x tile
                + 2 * d_model * tn * op_itemsize    # W tile
                + 2 * tn * 4                        # bias tile
                + 2 * tm * tn * inter_itemsize      # logits output tile
                + 2 * tm * 4                        # lse output
                + 2 * tm * 4                        # m/l scratch
                + (2 << 20))
    vmem_cap_limit = min(100 << 20, (vmem_cap * 3) // 4)   # ~48 MiB on v7x
    vmem_limit = int(min(max(vmem_est, 32 << 20), vmem_cap_limit))

    logits_raw, lse = pl.pallas_call(
        generator_kernel,
        out_shape=(jax.ShapeDtypeStruct((m_pad, vocab_pad), inter_dtype),
                   jax.ShapeDtypeStruct((m_pad, 1), jnp.float32)),
        grid_spec=pltpu.PrefetchScalarGridSpec(
            num_scalar_prefetch=0,
            grid=grid,
            in_specs=[
                pl.BlockSpec((tm, d_model), lambda i, j: (i, 0)),   # x rows
                pl.BlockSpec((d_model, tn), lambda i, j: (0, j)),   # W cols
                pl.BlockSpec((1, tn), lambda i, j: (0, j)),         # bias
            ],
            out_specs=[
                pl.BlockSpec((tm, tn), lambda i, j: (i, j)),        # raw logits
                pl.BlockSpec((tm, 1), lambda i, j: (i, 0)),         # per-row lse
            ],
            scratch_shapes=[
                pltpu.VMEM((tm, 1), jnp.float32),   # running max
                pltpu.VMEM((tm, 1), jnp.float32),   # running sum-exp
            ],
        ),
        compiler_params=pltpu.CompilerParams(
            dimension_semantics=("parallel", "arbitrary"),
            vmem_limit_bytes=vmem_limit,
        ),
        cost_estimate=cost,
    )(x2d, w, b2d)

    # Pass 2: cheap fused elementwise epilogue (XLA fuses slice + subtract +
    # cast into a single pass — padding never costs an extra HBM round trip).
    out2d = (logits_raw[:M, :vocab] - lse[:M]).astype(out_dtype)
    return out2d.reshape(batch, seq, vocab)


def _reference(x, weight, bias):
    logits = jnp.einsum("bsd,dv->bsv", x.astype(jnp.float32),
                        weight.astype(jnp.float32)) + bias.astype(jnp.float32)
    return jax.nn.log_softmax(logits, axis=-1)


if __name__ == "__main__":
    key = jax.random.PRNGKey(0)

    # Test 1: default fast path (bf16 MXU operands, f32 accumulate),
    # auto tile selection, 2 row tiles x 1 vocab tile.
    batch, seq, d_model, vocab_size = 2, 8, 32, 128
    kx, kw, kb = jax.random.split(key, 3)
    x = jax.random.normal(kx, (batch, seq, d_model), dtype=jnp.float32)
    weight = (jax.random.normal(kw, (d_model, vocab_size), dtype=jnp.float32)
              * (1.0 / jnp.sqrt(d_model)))
    bias = jax.random.normal(kb, (vocab_size,), dtype=jnp.float32) * 0.01

    out = jax.block_until_ready(generator_forward(x, weight, bias))
    ref = _reference(x, weight, bias)
    assert out.shape == (batch, seq, vocab_size)
    assert out.dtype == x.dtype
    assert jnp.allclose(out, ref, atol=5e-2, rtol=0), \
        float(jnp.abs(out - ref).max())

    # Test 2: ragged rows + ragged vocab, multiple row/vocab tiles, f32
    # compute -> tight tolerance exercises the online LSE accumulation,
    # padding mask, two-pass normalization and the 2-D grid exactly.
    batch2, seq2, d_model2, vocab2 = 2, 9, 32, 200
    kx2, kw2, kb2 = jax.random.split(jax.random.PRNGKey(1), 3)
    x2 = jax.random.normal(kx2, (batch2, seq2, d_model2), dtype=jnp.float32)
    w2 = (jax.random.normal(kw2, (d_model2, vocab2), dtype=jnp.float32)
          * (1.0 / jnp.sqrt(d_model2)))
    b2 = jax.random.normal(kb2, (vocab2,), dtype=jnp.float32) * 0.01

    out2 = jax.block_until_ready(
        generator_forward(x2, w2, b2, tm=8, tn=128,
                          compute_dtype=jnp.float32))
    ref2 = _reference(x2, w2, b2)
    assert out2.shape == (batch2, seq2, vocab2)
    assert jnp.allclose(out2, ref2, atol=1e-5, rtol=1e-5), \
        float(jnp.abs(out2 - ref2).max())

    print("KERNEL_OK")
</pallas_src>

<mosaic_0001>
module attributes {stable_mosaic.version = 11 : i64} {
  func.func @generator_kernel(%arg0: i32, %arg1: i32, %arg2: memref<8x32xbf16, #tpu.memory_space<vmem>>, %arg3: memref<32x128xbf16, #tpu.memory_space<vmem>>, %arg4: memref<1x128xf32, #tpu.memory_space<vmem>>, %arg5: memref<8x128xf32, #tpu.memory_space<vmem>>, %arg6: memref<8x1xf32, #tpu.memory_space<vmem>>, %arg7: memref<8x1xf32, #tpu.memory_space<vmem>>, %arg8: memref<8x1xf32, #tpu.memory_space<vmem>>) attributes {dimension_semantics = [#tpu.dimension_semantics<parallel>, #tpu.dimension_semantics<arbitrary>], iteration_bounds = array<i64: 2, 1>, scalar_prefetch = 0 : i64, scratch_operands = 2 : i64, tpu.core_type = #tpu.core_type<tc>, window_params = [{transform_indices = @transform_0, window_bounds = array<i64: 8, 32>}, {transform_indices = @transform_1, window_bounds = array<i64: 32, 128>}, {transform_indices = @transform_2, window_bounds = array<i64: 1, 128>}, {transform_indices = @transform_3, window_bounds = array<i64: 8, 128>}, {transform_indices = @transform_4, window_bounds = array<i64: 8, 1>}]} {
    %c0_i32 = arith.constant 0 : i32
    %0 = arith.cmpi eq, %arg1, %c0_i32 : i32
    %1 = arith.extui %0 : i1 to i32
    %c0_i32_0 = arith.constant 0 : i32
    %2 = arith.cmpi ne, %1, %c0_i32_0 : i32
    scf.if %2 {
      %cst_20 = arith.constant 0xFF800000 : f32
      %29 = vector.broadcast %cst_20 : f32 to vector<8x1xf32>
      %c0_21 = arith.constant 0 : index
      %c0_22 = arith.constant 0 : index
      %30 = vector.load %arg7[%c0_21, %c0_22] : memref<8x1xf32, #tpu.memory_space<vmem>>, vector<8x1xf32>
      tpu.vector_store %arg7[%c0_21, %c0_22], %29 {strides = array<i32>} : memref<8x1xf32, #tpu.memory_space<vmem>>, vector<8x1xf32>,
      %cst_23 = arith.constant 0.000000e+00 : f32
      %31 = vector.broadcast %cst_23 : f32 to vector<8x1xf32>
      %c0_24 = arith.constant 0 : index
      %c0_25 = arith.constant 0 : index
      %32 = vector.load %arg8[%c0_24, %c0_25] : memref<8x1xf32, #tpu.memory_space<vmem>>, vector<8x1xf32>
      tpu.vector_store %arg8[%c0_24, %c0_25], %31 {strides = array<i32>} : memref<8x1xf32, #tpu.memory_space<vmem>>, vector<8x1xf32>,
    } else {
    }
    %c0 = arith.constant 0 : index
    %c0_1 = arith.constant 0 : index
    %3 = vector.load %arg2[%c0, %c0_1] : memref<8x32xbf16, #tpu.memory_space<vmem>>, vector<8x32xbf16>
    %c0_2 = arith.constant 0 : index
    %c0_3 = arith.constant 0 : index
    %4 = vector.load %arg3[%c0_2, %c0_3] : memref<32x128xbf16, #tpu.memory_space<vmem>>, vector<32x128xbf16>
    %cst = arith.constant dense<0.000000e+00> : vector<8x128xf32>
    %5 = tpu.matmul %3, %4, %cst {dimension_numbers = #tpu.dot_dimension_numbers<[1], [0], [0], [1], [0, 0, 1, 1], [], []>} : vector<8x32xbf16>, vector<32x128xbf16>, vector<8x128xf32> -> vector<8x128xf32>
    %c0_4 = arith.constant 0 : index
    %c0_5 = arith.constant 0 : index
    %6 = vector.load %arg4[%c0_4, %c0_5] : memref<1x128xf32, #tpu.memory_space<vmem>>, vector<1x128xf32>
    %7 = vector.broadcast %6 : vector<1x128xf32> to vector<8x128xf32>
    %8 = arith.addf %5, %7 : vector<8x128xf32>
    %c0_6 = arith.constant 0 : index
    %c0_7 = arith.constant 0 : index
    %9 = vector.load %arg5[%c0_6, %c0_7] : memref<8x128xf32, #tpu.memory_space<vmem>>, vector<8x128xf32>
    tpu.vector_store %arg5[%c0_6, %c0_7], %8 {strides = array<i32>} : memref<8x128xf32, #tpu.memory_space<vmem>>, vector<8x128xf32>,
    %c0_8 = arith.constant 0 : index
    %c0_9 = arith.constant 0 : index
    %10 = vector.load %arg7[%c0_8, %c0_9] : memref<8x1xf32, #tpu.memory_space<vmem>>, vector<8x1xf32>
    %cst_10 = arith.constant dense<0xFF800000> : vector<8xf32>
    %11 = vector.multi_reduction <maximumf>, %8, %cst_10 [1] : vector<8x128xf32> to vector<8xf32>
    %12 = vector.shape_cast %11 : vector<8xf32> to vector<8x1xf32>
    %13 = arith.maximumf %10, %12 : vector<8x1xf32>
    %c0_11 = arith.constant 0 : index
    %c0_12 = arith.constant 0 : index
    %14 = vector.load %arg8[%c0_11, %c0_12] : memref<8x1xf32, #tpu.memory_space<vmem>>, vector<8x1xf32>
    %15 = arith.subf %10, %13 : vector<8x1xf32>
    %16 = math.exp %15 : vector<8x1xf32>
    %17 = arith.mulf %14, %16 : vector<8x1xf32>
    %18 = vector.broadcast %13 : vector<8x1xf32> to vector<8x128xf32>
    %19 = arith.subf %8, %18 : vector<8x128xf32>
    %20 = math.exp %19 : vector<8x128xf32>
    %cst_13 = arith.constant dense<0.000000e+00> : vector<8xf32>
    %21 = vector.multi_reduction <add>, %20, %cst_13 [1] : vector<8x128xf32> to vector<8xf32>
    %22 = vector.shape_cast %21 : vector<8xf32> to vector<8x1xf32>
    %23 = arith.addf %17, %22 : vector<8x1xf32>
    %c0_14 = arith.constant 0 : index
    %c0_15 = arith.constant 0 : index
    %24 = vector.load %arg8[%c0_14, %c0_15] : memref<8x1xf32, #tpu.memory_space<vmem>>, vector<8x1xf32>
    tpu.vector_store %arg8[%c0_14, %c0_15], %23 {strides = array<i32>} : memref<8x1xf32, #tpu.memory_space<vmem>>, vector<8x1xf32>,
    %c0_16 = arith.constant 0 : index
    %c0_17 = arith.constant 0 : index
    %25 = vector.load %arg7[%c0_16, %c0_17] : memref<8x1xf32, #tpu.memory_space<vmem>>, vector<8x1xf32>
    tpu.vector_store %arg7[%c0_16, %c0_17], %13 {strides = array<i32>} : memref<8x1xf32, #tpu.memory_space<vmem>>, vector<8x1xf32>,
    %c0_i32_18 = arith.constant 0 : i32
    %26 = arith.cmpi eq, %arg1, %c0_i32_18 : i32
    %27 = arith.extui %26 : i1 to i32
    %c0_i32_19 = arith.constant 0 : i32
    %28 = arith.cmpi ne, %27, %c0_i32_19 : i32
    scf.if %28 {
      %c0_20 = arith.constant 0 : index
      %c0_21 = arith.constant 0 : index
      %29 = vector.load %arg7[%c0_20, %c0_21] : memref<8x1xf32, #tpu.memory_space<vmem>>, vector<8x1xf32>
      %c0_22 = arith.constant 0 : index
      %c0_23 = arith.constant 0 : index
      %30 = vector.load %arg8[%c0_22, %c0_23] : memref<8x1xf32, #tpu.memory_space<vmem>>, vector<8x1xf32>
      %31 = math.log %30 : vector<8x1xf32>
      %32 = arith.addf %29, %31 : vector<8x1xf32>
      %c0_24 = arith.constant 0 : index
      %c0_25 = arith.constant 0 : index
      %33 = vector.load %arg6[%c0_24, %c0_25] : memref<8x1xf32, #tpu.memory_space<vmem>>, vector<8x1xf32>
      tpu.vector_store %arg6[%c0_24, %c0_25], %32 {strides = array<i32>} : memref<8x1xf32, #tpu.memory_space<vmem>>, vector<8x1xf32>,
    } else {
    }
    return
  }
  func.func @transform_0(%arg0: i32, %arg1: i32) -> (i32, i32) {
    %c0_i32 = arith.constant 0 : i32
    %c0_i32_0 = arith.constant 0 : i32
    return %arg0, %c0_i32 : i32, i32
  }
  func.func @transform_1(%arg0: i32, %arg1: i32) -> (i32, i32) {
    %c0_i32 = arith.constant 0 : i32
    %c0_i32_0 = arith.constant 0 : i32
    return %c0_i32, %arg1 : i32, i32
  }
  func.func @transform_2(%arg0: i32, %arg1: i32) -> (i32, i32) {
    %c0_i32 = arith.constant 0 : i32
    %c0_i32_0 = arith.constant 0 : i32
    return %c0_i32, %arg1 : i32, i32
  }
  func.func @transform_3(%arg0: i32, %arg1: i32) -> (i32, i32) {
    %c0_i32 = arith.constant 0 : i32
    return %arg0, %arg1 : i32, i32
  }
  func.func @transform_4(%arg0: i32, %arg1: i32) -> (i32, i32) {
    %c0_i32 = arith.constant 0 : i32
    %c0_i32_0 = arith.constant 0 : i32
    return %arg0, %c0_i32 : i32, i32
  }
}

</mosaic_0001>

<llo_original>
// kernel: tpu_custom_call.1
$region0: #{tpu_custom_call.1}
  #allocation0 [shape = 'u32[]', space=smem, size = 0x4, offset = 0x4, fixed_abs, tag = 'smem constant byte address 0x4 - core index']
  #allocation1 [shape = 'u32[144,128]{1,0:T(1,128)}', space=vmem, size = 0x12000, scoped, tag = 'internal scratch']
  #allocation2 [shape = 'f32[8,1]{1,0:T(8,128)}', space=vmem, size = 0x1000, scoped, tag = 'scratch operand']
  #allocation3 [shape = 'f32[8,1]{1,0:T(8,128)}', space=vmem, size = 0x1000, scoped, tag = 'scratch operand']
  %s0 = inlined_call_operand.hbm [shape: bf16[16,32], index: 0, kind: input, shape index: {}]
  %s1 = inlined_call_operand.hbm [shape: bf16[32,128], index: 1, kind: input, shape index: {}]
  %s2 = inlined_call_operand.vmem [shape: f32[1,128], index: 2, kind: input, shape index: {}]
  %s3 = inlined_call_operand.hbm [shape: f32[16,128], index: 3, kind: output, shape index: {0}]
  %s4 = inlined_call_operand.vmem [shape: f32[16,1], index: 4, kind: output, shape index: {1}]
  %5 = xla_tuple %s3, %s4
  %s6 = sld [smem:[#allocation0]]
  $region69: #{tpu_custom_call.1} parent=0
    _
  %s8 = ssub.s32 1, %s6
  %s9 = scalar_select 0, %s8, %s6
  $region1: #{tpu_custom_call.1} parent=0
    #allocation4 [shape = 'u8[4096]{0}', space=vmem, size = 0x1000, scoped, tag = 'input window, operand 0']
    #allocation5 [shape = 's32[2]{0}', space=sflag, size = 0x8, scoped, tag = 'scoped memory for tpu_custom_call.1']
    #allocation6 [shape = 's32[2]{0}', space=sflag, size = 0x8, scoped, tag = 'scoped memory for tpu_custom_call.1']
    #allocation7 [shape = 'u8[8192]{0}', space=vmem, size = 0x2000, scoped, tag = 'input window, operand 1, single buffered']
    #allocation8 [shape = 's32[1]{0}', space=sflag, size = 0x4, scoped, tag = 'scoped memory for tpu_custom_call.1']
    #allocation9 [shape = 'u8[8192]{0}', space=vmem, size = 0x2000, scoped, tag = 'output window, operand 0']
    %10 = vsyncpa [#allocation5], 0
    %s11 = scalar_lea.sflag [#allocation5], 1
    %12 = vsyncpa %s11, 0
    %13 = vsyncpa [#allocation8], 0
    %14 = vsyncpa [#allocation6], 0
    %s15 = scalar_lea.sflag [#allocation6], 1
    %16 = vsyncpa %s15, 0
    loop: start=0, step=1, limit=4
    $region2: #{tpu_custom_call.1} parent=1 // loop_pre_header
      _
    $region3: #{tpu_custom_call.1} parent=1 // loop_header
      %s18 = sphi 0, %s22
      %p19 = scmp.ge.s32.totalorder %s18, 4
      %s25 = sphi 0, %s37
      %s26 = sphi 0, %s33
      %s27 = sphi 0, %s25
      %s28 = sphi 0, %s26
      %s29 = sphi 0, %s27
      %s30 = sphi 0, %s28
      %s40 = sphi 0, %s42
      %s43 = sphi 0, %s40
      %s44 = sphi 0, %s43
      %s60 = sphi 0, %s44
      %s66 = sphi 0, %s68
      %s69 = sphi 0, %s66
      %s70 = sphi 0, %s69
      %s86 = sphi 0, %s70
      %s92 = sphi 0, %s94
      %s95 = sphi 0, %s92
      %s96 = sphi 0, %s95
      %s112 = sphi 0, %s96
      %s120 = sphi 0, %s122
      %s123 = sphi 0, %s120
      %s124 = sphi 0, %s123
      %s140 = sphi 0, %s124
      %s146 = sphi 0, %s148
      %s149 = sphi 0, %s146
      %s150 = sphi 0, %s149
      %s166 = sphi 0, %s150
    $region4: #{tpu_custom_call.1} parent=1 // loop_header_branch
      %21 = sbr.rel (%p19) target = $region8
    $region5: #{tpu_custom_call.1} parent=1 // loop_body
      %s23 = ssub.s32 %s18, 1
      %s24 = ssub.s32 %s18, 2
      %s31 = sadd.s32 1, %s26
      %p32 = scmp.ge.s32.totalorder %s31, 1
      %s33 = scalar_select %p32, 0, %s31
      %s34 = sadd.s32 1, %s25
      %s35 = scalar_select %p32, %s34, %s25
      %p36 = scmp.ge.s32.totalorder %s35, 2
      %s37 = scalar_select %p36, 0, %s35
      %s38 = ssub.s32 %s25, %s37
      %p39 = scmp.eq.s32.totalorder %s38, 0
      %s41 = sadd.s32 %s40, 1
      %s42 = scalar_select %p39, %s40, %s41
      %p45 = pneg %p39
      %p46 = scmp.eq.s32.totalorder %s18, 1
      %p47 = por %p45, %p46
      %p48 = scmp.ne.s32.totalorder %s40, %s43
      %p49 = scmp.eq.s32.totalorder %s18, 0
      %p50 = por %p48, %p49
      %p51 = scmp.ne.s32.totalorder %s40, %s43
      %p52 = scmp.eq.s32.totalorder %s23, 1
      %p53 = por %p51, %p52
      %p54 = scmp.ne.s32.totalorder %s43, %s44
      %p55 = scmp.eq.s32.totalorder %s23, 0
      %p56 = por %p54, %p55
      %p57 = scmp.ne.s32.totalorder %s43, %s44
      %p58 = scmp.eq.s32.totalorder %s24, 1
      %p59 = por %p57, %p58
      %p61 = scmp.ne.s32.totalorder %s44, %s60
      %p62 = scmp.eq.s32.totalorder %s24, 0
      %p63 = por %p61, %p62
      %s64 = ssub.s32 %s26, %s33
      %p65 = scmp.eq.s32.totalorder %s64, 0
      %s67 = sadd.s32 %s66, 1
      %s68 = scalar_select %p65, %s66, %s67
      %p71 = pneg %p65
      %p72 = scmp.eq.s32.totalorder %s18, 1
      %p73 = por %p71, %p72
      %p74 = scmp.ne.s32.totalorder %s66, %s69
      %p75 = scmp.eq.s32.totalorder %s18, 0
      %p76 = por %p74, %p75
      %p77 = scmp.ne.s32.totalorder %s66, %s69
      %p78 = scmp.eq.s32.totalorder %s23, 1
      %p79 = por %p77, %p78
      %p80 = scmp.ne.s32.totalorder %s69, %s70
      %p81 = scmp.eq.s32.totalorder %s23, 0
      %p82 = por %p80, %p81
      %p83 = scmp.ne.s32.totalorder %s69, %s70
      %p84 = scmp.eq.s32.totalorder %s24, 1
      %p85 = por %p83, %p84
      %p87 = scmp.ne.s32.totalorder %s70, %s86
      %p88 = scmp.eq.s32.totalorder %s24, 0
      %p89 = por %p87, %p88
      %s90 = ssub.s32 %s26, %s33
      %p91 = scmp.eq.s32.totalorder %s90, 0
      %s93 = sadd.s32 %s92, 1
      %s94 = scalar_select %p91, %s92, %s93
      %p97 = pneg %p91
      %p98 = scmp.eq.s32.totalorder %s18, 1
      %p99 = por %p97, %p98
      %p100 = scmp.ne.s32.totalorder %s92, %s95
      %p101 = scmp.eq.s32.totalorder %s18, 0
      %p102 = por %p100, %p101
      %p103 = scmp.ne.s32.totalorder %s92, %s95
      %p104 = scmp.eq.s32.totalorder %s23, 1
      %p105 = por %p103, %p104
      %p106 = scmp.ne.s32.totalorder %s95, %s96
      %p107 = scmp.eq.s32.totalorder %s23, 0
      %p108 = por %p106, %p107
      %p109 = scmp.ne.s32.totalorder %s95, %s96
      %p110 = scmp.eq.s32.totalorder %s24, 1
      %p111 = por %p109, %p110
      %p113 = scmp.ne.s32.totalorder %s96, %s112
      %p114 = scmp.eq.s32.totalorder %s24, 0
      %p115 = por %p113, %p114
      %s116 = ssub.s32 %s25, %s37
      %s117 = ssub.s32 %s26, %s33
      %s118 = sor.u32 %s116, %s117
      %p119 = scmp.eq.s32.totalorder %s118, 0
      %s121 = sadd.s32 %s120, 1
      %s122 = scalar_select %p119, %s120, %s121
      %p125 = pneg %p119
      %p126 = scmp.eq.s32.totalorder %s18, 1
      %p127 = por %p125, %p126
      %p128 = scmp.ne.s32.totalorder %s120, %s123
      %p129 = scmp.eq.s32.totalorder %s18, 0
      %p130 = por %p128, %p129
      %p131 = scmp.ne.s32.totalorder %s120, %s123
      %p132 = scmp.eq.s32.totalorder %s23, 1
      %p133 = por %p131, %p132
      %p134 = scmp.ne.s32.totalorder %s123, %s124
      %p135 = scmp.eq.s32.totalorder %s23, 0
      %p136 = por %p134, %p135
      %p137 = scmp.ne.s32.totalorder %s123, %s124
      %p138 = scmp.eq.s32.totalorder %s24, 1
      %p139 = por %p137, %p138
      %p141 = scmp.ne.s32.totalorder %s124, %s140
      %p142 = scmp.eq.s32.totalorder %s24, 0
      %p143 = por %p141, %p142
      %s144 = ssub.s32 %s25, %s37
      %p145 = scmp.eq.s32.totalorder %s144, 0
      %s147 = sadd.s32 %s146, 1
      %s148 = scalar_select %p145, %s146, %s147
      %p151 = pneg %p145
      %p152 = scmp.eq.s32.totalorder %s18, 1
      %p153 = por %p151, %p152
      %p154 = scmp.ne.s32.totalorder %s146, %s149
      %p155 = scmp.eq.s32.totalorder %s18, 0
      %p156 = por %p154, %p155
      %p157 = scmp.ne.s32.totalorder %s146, %s149
      %p158 = scmp.eq.s32.totalorder %s23, 1
      %p159 = por %p157, %p158
      %p160 = scmp.ne.s32.totalorder %s149, %s150
      %p161 = scmp.eq.s32.totalorder %s23, 0
      %p162 = por %p160, %p161
      %p163 = scmp.ne.s32.totalorder %s149, %s150
      %p164 = scmp.eq.s32.totalorder %s24, 1
      %p165 = por %p163, %p164
      %p167 = scmp.ne.s32.totalorder %s150, %s166
      %p168 = scmp.eq.s32.totalorder %s24, 0
      %p169 = por %p167, %p168
      %p170 = scmp.le.s32.totalorder 1, %s18
      %p171 = scmp.lt.s32.totalorder %s18, 3
      %p172 = pnand %p170, %p171
      %p173 = pneg %p172
      // Predicated region
      $region9: #{tpu_custom_call.1} parent=5 // pred_check
        _
      $region10: #{tpu_custom_call.1} parent=5 // pred_check_branch
        %175 = sbr.rel (%p172) target = $region12
      $region11: #{tpu_custom_call.1} parent=5 // pred_region
        %s176 = ssub.s32 %s18, 1
        // Predicated region
        $region13: #{tpu_custom_call.1} parent=11 // pred_check
          %p177 = pneg %p82
        $region14: #{tpu_custom_call.1} parent=11 // pred_check_branch
          %179 = sbr.rel (%p177) target = $region16
        $region15: #{tpu_custom_call.1} parent=11 // pred_region
          %s181 = ssub.s32 256, 256
          %182 = vsyncadd [#allocation8], %s181
          %s183 = smul.addr %s28, 64
          %s184 = scalar_lea.hbm %s1, %s183
          %s185 = sshll.u32 [#allocation7], 4
          %s186 = int_to_ptr.vmem [resolvable:$true] %s185
          %191 = dma.hbm_to_vmem [thread:$0]  %s184, 256, %s186, [#allocation8], 64, 64, 4
        $region16: #{tpu_custom_call.1} parent=11 // pred_fallthru
          _
        // Predicated region
        $region17: #{tpu_custom_call.1} parent=11 // pred_check
          %p192 = pneg %p108
        $region18: #{tpu_custom_call.1} parent=11 // pred_check_branch
          %194 = sbr.rel (%p192) target = $region20
        $region19: #{tpu_custom_call.1} parent=11 // pred_region
          %p195 = scmp.lt.s32.totalorder %s28, 0
          %s196 = scalar_select %p195, %s28, 0
          %s197 = scalar_lea.vmem %s2, %s196
        $region20: #{tpu_custom_call.1} parent=11 // pred_fallthru
          _
      $region12: #{tpu_custom_call.1} parent=5 // pred_fallthru
        _
      %p198 = scmp.lt.s32.totalorder %s18, 2
      // Predicated region
      $region21: #{tpu_custom_call.1} parent=5 // pred_check
        %p199 = pneg %p198
      $region22: #{tpu_custom_call.1} parent=5 // pred_check_branch
        %201 = sbr.rel (%p199) target = $region24
      $region23: #{tpu_custom_call.1} parent=5 // pred_region
        // Predicated region
        $region25: #{tpu_custom_call.1} parent=23 // pred_check
          %p202 = pneg %p50
        $region26: #{tpu_custom_call.1} parent=23 // pred_check_branch
          %204 = sbr.rel (%p202) target = $region28
        $region27: #{tpu_custom_call.1} parent=23 // pred_region
          %s205 = sand.u32 %s40, 1
          %s206 = scalar_lea.sflag [#allocation5], %s205
          %s207 = sand.u32 %s40, 1
          %s208 = smul.addr %s207, 4
          %s209 = scalar_lea.vmem [#allocation4], %s208
          %s211 = ssub.s32 64, 64
          %212 = vsyncadd %s206, %s211
          %s213 = smul.addr %s25, 64
          %s214 = scalar_lea.hbm %s0, %s213
          %s216 = sshll.u32 %s209, 4
          %s217 = int_to_ptr.vmem [resolvable:$true] %s216
          %219 = dma.hbm_to_vmem [thread:$0]  %s214, 64, %s217, %s206
        $region28: #{tpu_custom_call.1} parent=23 // pred_fallthru
          _
      $region24: #{tpu_custom_call.1} parent=5 // pred_fallthru
        _
      %p220 = scmp.le.s32.totalorder 1, %s18
      %p221 = scmp.lt.s32.totalorder %s18, 3
      %p222 = pnand %p220, %p221
      %p223 = pneg %p222
      // Predicated region
      $region29: #{tpu_custom_call.1} parent=5 // pred_check
        _
      $region30: #{tpu_custom_call.1} parent=5 // pred_check_branch
        %225 = sbr.rel (%p222) target = $region32
      $region31: #{tpu_custom_call.1} parent=5 // pred_region
        %s226 = ssub.s32 %s18, 1
        %s227 = sand.u32 %s43, 1
        %s228 = scalar_lea.sflag [#allocation5], %s227
        %s229 = sand.u32 %s43, 1
        %s230 = smul.addr %s229, 4
        %s231 = scalar_lea.vmem [#allocation4], %s230
        // Predicated region
        $region33: #{tpu_custom_call.1} parent=31 // pred_check
          %p232 = pneg %p56
        $region34: #{tpu_custom_call.1} parent=31 // pred_check_branch
          %234 = sbr.rel (%p232) target = $region36
        $region35: #{tpu_custom_call.1} parent=31 // pred_region
          %235 = dma.done %s228, 64
        $region36: #{tpu_custom_call.1} parent=31 // pred_fallthru
          _
        // Predicated region
        $region37: #{tpu_custom_call.1} parent=31 // pred_check
          %p236 = pneg %p82
        $region38: #{tpu_custom_call.1} parent=31 // pred_check_branch
          %238 = sbr.rel (%p236) target = $region40
        $region39: #{tpu_custom_call.1} parent=31 // pred_region
          %239 = dma.done [#allocation8], 256
        $region40: #{tpu_custom_call.1} parent=31 // pred_fallthru
          _
        %s240 = sand.u32 %s43, 1
        %s241 = scalar_lea.sflag [#allocation5], %s240
        %s242 = sand.u32 %s43, 1
        %s243 = smul.addr %s242, 4
        %s244 = scalar_lea.vmem [#allocation4], %s243
        %p245 = pneg %p56
        %p246 = pneg %p53
        %p247 = pneg %p82
        %p248 = pneg %p79
        %p249 = scmp.lt.s32.totalorder %s28, 0
        %s250 = scalar_select %p249, %s28, 0
        %s251 = scalar_lea.vmem %s2, %s250
        %p252 = pneg %p108
        %p253 = pneg %p105
        %p254 = pneg %p136
        %p255 = pneg %p133
        %s256 = sand.u32 %s123, 1
        %s257 = scalar_lea.sflag [#allocation6], %s256
        %s258 = sand.u32 %s123, 1
        %s259 = smul.addr %s258, 8
        %s260 = scalar_lea.vmem [#allocation9], %s259
        %p261 = pneg %p162
        %p262 = pneg %p159
        %p263 = scmp.lt.s32.totalorder %s27, 1
        %s264 = scalar_select %p263, %s27, 1
        %s265 = smul.addr %s264, 8
        %s266 = scalar_lea.vmem %s4, %s265
        %p267 = scmp.lt.s32.totalorder %s28, 0
        %s268 = scalar_select %p267, %s28, 0
        %s269 = scalar_lea.vmem %s2, %s268
        %p270 = scmp.lt.s32.totalorder %s27, 1
        %s271 = scalar_select %p270, %s27, 1
        %s272 = smul.addr %s271, 8
        %s273 = scalar_lea.vmem %s4, %s272
        %p275 = scmp.eq.s32.totalorder %s28, 0
        // Predicated region
        $region41: #{tpu_custom_call.1} parent=31 // pred_check
          %p276 = pneg %p275
        $region42: #{tpu_custom_call.1} parent=31 // pred_check_branch
          %278 = sbr.rel (%p276) target = $region44
        $region43: #{tpu_custom_call.1} parent=31 // pred_region
          %vm279 = vcmask 7168
          %280 = vst.msk [vmem:[#allocation2] sm:$0xff] %vm279, -inf
          %281 = vst.msk [vmem:[#allocation3] sm:$0xff] %vm279, 0.0
        $region44: #{tpu_custom_call.1} parent=31 // pred_fallthru
          _
        %v282 = vld [vmem:[%s231] sm:$0xf]
        %v283 = vld [vmem:[#allocation7] sm:$0xf]
        %v284 = vld [vmem:[#allocation7 + $0x4] sm:$0xf]
        %v285 = vld [vmem:[#allocation7 + $0x8] sm:$0xf]
        %v286 = vld [vmem:[#allocation7 + $0xc] sm:$0xf]
        %v287 = vld [vmem:[%s269] sm:$0x1]
        %v289 = vlaneseq
        %v290 = vshrl.u32 %v289, 7
        %v291 = vsub.s32 0, %v290
        %v292 = vrot.slane %v287, %v291
        %v298 = vunpack.c.l.b16 %v283
        %v299 = vunpack.c.l.b16 %v284
        %v300 = vunpack.c.l.b16 %v285
        %v301 = vunpack.c.l.b16 %v286
        %v302 = vpack.c.b16 %v299, %v298
        %v303 = vpack.c.b16 %v301, %v300
        %vm306 = vcmask 261120
        %v308 = vsel %vm306, %v282, 0
        %310 = vmatprep.subr.bf16.mxu0 0
        %311 = vmatpush1.bf16.msra.mxu0 %v302
        %312 = vmatprep.subr.bf16.mxu0 0
        %313 = vmatpush1.bf16.msra.mxu0 %v303
        %314 = vmatprep.subr.bf16.mxu0 0
        %315 = vmatpush1.bf16.msra.mxu0 0
        %316 = vmatprep.subr.bf16.mxu0 0
        %317 = vmatpush1.bf16.msra.mxu0 0
        %318 = vmatprep.subr.bf16.mxu0 0
        %319 = vmatpush1.bf16.msra.mxu0 0
        %320 = vmatprep.subr.bf16.mxu0 0
        %321 = vmatpush1.bf16.msra.mxu0 0
        %322 = vmatprep.subr.bf16.mxu0 0
        %323 = vmatpush1.bf16.msra.mxu0 0
        %324 = vmatprep.subr.bf16.mxu0 0
        %325 = vmatpush1.bf16.msra.mxu0 0
        %326 = vmatprep.subr.bf16.mxu0 0
        %327 = vmatpush1.bf16.msra.mxu0 0
        %328 = vmatprep.subr.bf16.mxu0 0
        %329 = vmatpush1.bf16.msra.mxu0 0
        %330 = vmatprep.subr.bf16.mxu0 0
        %331 = vmatpush1.bf16.msra.mxu0 0
        %332 = vmatprep.subr.bf16.mxu0 0
        %333 = vmatpush1.bf16.msra.mxu0 0
        %334 = vmatprep.subr.bf16.mxu0 0
        %335 = vmatpush1.bf16.msra.mxu0 0
        %336 = vmatprep.subr.bf16.mxu0 0
        %337 = vmatpush1.bf16.msra.mxu0 0
        %338 = vmatprep.subr.bf16.mxu0 0
        %339 = vmatpush1.bf16.msra.mxu0 0
        %340 = vmatprep.subr.bf16.mxu0 0
        %341 = vmatpush1.bf16.msra.mxu0 0
        %342 = vmatprep.mubr.bf16.mxu0 0
        %343 = vmatmul.mubr.bf16.gmra.mrb[0].mxu0 %v308
        %v344 = vpop.f32.mrb[0].mxu0
        %v345 = vadd.f32 %v292, %v344
        %v346 = vpop.f32.mrb[0].mxu0
        %v347 = vpop.f32.mrb[0].mxu0
        %v348 = vpop.f32.mrb[0].mxu0
        %349 = vdwg.mxu0
        %350 = vst [vmem:[%s260] sm:$0xff] %v345
        %v351 = vld [vmem:[#allocation2] sm:$0xff]
        %352 = vmax.xlane.f32.xlu0 %v345
        %v353 = vpop.xlane.xlu0 %352
        %v354 = vmax.f32 %v351, %v353
        %v355 = vld [vmem:[#allocation3] sm:$0xff]
        %v356 = vsub.f32 %v351, %v354
        %v357 = vmul.f32 %v356, 1.442695
        %v358 = vpow.pop %v357
        %v359 = vmul.f32 %v355, %v358
        %361 = vset.pattern.permute.xlu0 0
        %362 = vperm.xlu0 %361, %v354
        %v363 = vpop.permute.xlu0 %362
        %v365 = vsub.f32 %v345, %v363
        %v366 = vmul.f32 %v365, 1.442695
        %v367 = vpow.pop %v366
        %368 = vadd.xlane.f32.xlu0 %v367
        %v369 = vpop.xlane.xlu0 %368
        %v370 = vadd.f32 %v359, %v369
        %vm371 = vcmask 7168
        %372 = vst.msk [vmem:[#allocation3] sm:$0xff] %vm371, %v370
        %373 = vst.msk [vmem:[#allocation2] sm:$0xff] %vm371, %v354
        // Predicated region
        $region45: #{tpu_custom_call.1} parent=31 // pred_check
          %p374 = pneg %p275
        $region46: #{tpu_custom_call.1} parent=31 // pred_check_branch
          %376 = sbr.rel (%p374) target = $region48
        $region47: #{tpu_custom_call.1} parent=31 // pred_region
          %v377 = vld [vmem:[#allocation2] sm:$0xff]
          %v378 = vld [vmem:[#allocation3] sm:$0xff]
          %v379 = vlog2.pop %v378
          %v380 = vmul.f32 %v379, 0.6931472
          %v381 = vadd.f32 %v377, %v380
          %382 = vst.msk [vmem:[%s273] sm:$0xff] %vm371, %v381
        $region48: #{tpu_custom_call.1} parent=31 // pred_fallthru
          _
        %s383 = sand.u32 %s123, 1
        %s384 = scalar_lea.sflag [#allocation6], %s383
        %s385 = sand.u32 %s123, 1
        %s386 = smul.addr %s385, 8
        %s387 = scalar_lea.vmem [#allocation9], %s386
        %p388 = scmp.lt.s32.totalorder %s27, 1
        %s389 = scalar_select %p388, %s27, 1
        %s390 = smul.addr %s389, 8
        %s391 = scalar_lea.vmem %s4, %s390
        // Predicated region
        $region49: #{tpu_custom_call.1} parent=31 // pred_check
          %p392 = pneg %p133
        $region50: #{tpu_custom_call.1} parent=31 // pred_check_branch
          %394 = sbr.rel (%p392) target = $region52
        $region51: #{tpu_custom_call.1} parent=31 // pred_region
          %s396 = ssub.s32 128, 128
          %397 = vsyncadd %s384, %s396
          %s398 = sadd.s32 %s28, %s27
          %s399 = smul.addr %s398, 128
          %s400 = scalar_lea.hbm %s3, %s399
          %s402 = sshll.u32 %s387, 4
          %s403 = int_to_ptr.vmem [resolvable:$true] %s402
          %405 = dma.vmem_to_hbm [thread:$0]  %s403, 128, %s400, %s384
        $region52: #{tpu_custom_call.1} parent=31 // pred_fallthru
          _
        // Predicated region
        $region53: #{tpu_custom_call.1} parent=31 // pred_check
          %p406 = pneg %p159
        $region54: #{tpu_custom_call.1} parent=31 // pred_check_branch
          %408 = sbr.rel (%p406) target = $region56
        $region55: #{tpu_custom_call.1} parent=31 // pred_region
          _
        $region56: #{tpu_custom_call.1} parent=31 // pred_fallthru
          _
      $region32: #{tpu_custom_call.1} parent=5 // pred_fallthru
        _
      %p409 = scmp.le.s32.totalorder 2, %s18
      // Predicated region
      $region57: #{tpu_custom_call.1} parent=5 // pred_check
        %p410 = pneg %p409
      $region58: #{tpu_custom_call.1} parent=5 // pred_check_branch
        %412 = sbr.rel (%p410) target = $region60
      $region59: #{tpu_custom_call.1} parent=5 // pred_region
        %s413 = ssub.s32 %s18, 2
        // Predicated region
        $region61: #{tpu_custom_call.1} parent=59 // pred_check
          %p414 = pneg %p139
        $region62: #{tpu_custom_call.1} parent=59 // pred_check_branch
          %416 = sbr.rel (%p414) target = $region64
        $region63: #{tpu_custom_call.1} parent=59 // pred_region
          %s417 = sand.u32 %s124, 1
          %s418 = scalar_lea.sflag [#allocation6], %s417
          %s419 = sand.u32 %s124, 1
          %s420 = smul.addr %s419, 8
          %s421 = scalar_lea.vmem [#allocation9], %s420
          %422 = dma.done %s418, 128
        $region64: #{tpu_custom_call.1} parent=59 // pred_fallthru
          _
        // Predicated region
        $region65: #{tpu_custom_call.1} parent=59 // pred_check
          %p423 = pneg %p165
        $region66: #{tpu_custom_call.1} parent=59 // pred_check_branch
          %425 = sbr.rel (%p423) target = $region68
        $region67: #{tpu_custom_call.1} parent=59 // pred_region
          %p426 = scmp.lt.s32.totalorder %s29, 1
          %s427 = scalar_select %p426, %s29, 1
          %s428 = smul.addr %s427, 8
          %s429 = scalar_lea.vmem %s4, %s428
        $region68: #{tpu_custom_call.1} parent=59 // pred_fallthru
          _
      $region60: #{tpu_custom_call.1} parent=5 // pred_fallthru
        _
    $region6: #{tpu_custom_call.1} parent=1 // loop_footer
      %s22 = sadd.s32 1, %s18
    $region7: #{tpu_custom_call.1} parent=1 // loop_footer_branch
      %17 = sbr.rel target = $region3
    $region8: #{tpu_custom_call.1} parent=1 // loop_exit
      _
    %430 = vsyncpa [#allocation5], 1
    %s431 = scalar_lea.sflag [#allocation5], 1
    %432 = vsyncpa %s431, 1
    %433 = vsyncpa [#allocation8], 1
    %434 = vsyncpa [#allocation6], 1
    %s435 = scalar_lea.sflag [#allocation6], 1
    %436 = vsyncpa %s435, 1

</llo_original>
